<compile_context>
chip_gen: v5e
topology: v5e:2x2
jax: 0.10.0
libtpu: 0.0.40
codegen_flags: <defaults>
</compile_context>

<pallas_src>
import math

import jax
import jax.numpy as jnp
from jax.experimental import pallas as pl
from jax.experimental.pallas import tpu as pltpu

_MiB = 1024 * 1024


def _round_up(x, m):
    return ((x + m - 1) // m) * m


def _cdiv(a, b):
    return -(-a // b)


def _fit_tile(dim, t_max, align):
    """Pick an `align`-multiple tile <= t_max that keeps the same tile count as
    a fixed t_max tile would, but minimizes padding of `dim`.
    Returns (tile, padded_dim)."""
    dim_a = _round_up(dim, align)
    t_cap = max(align, _round_up(min(t_max, dim_a), align))
    n_tiles = _cdiv(dim_a, t_cap)
    t = _round_up(_cdiv(dim, n_tiles), align)
    return t, n_tiles * t


# ----------------------------------------------------------------------------
# Kernel bodies
# ----------------------------------------------------------------------------

def _kres_kernel_bias(x_ref, w_ref, b_ref, o_ref):
    # x: (tm, Kp)  w: (Kp, tn)  b: (1, tn)  o: (tm, tn).  Full-K dot, no scratch.
    acc = jnp.dot(x_ref[...], w_ref[...], preferred_element_type=jnp.float32)
    o_ref[...] = (acc + b_ref[...].astype(jnp.float32)).astype(o_ref.dtype)


def _kres_kernel_nobias(x_ref, w_ref, o_ref):
    o_ref[...] = jnp.dot(x_ref[...], w_ref[...],
                         preferred_element_type=jnp.float32).astype(o_ref.dtype)


def _kgrid_kernel_bias(x_ref, w_ref, b_ref, o_ref, acc_ref):
    k = pl.program_id(2)

    @pl.when(k == 0)
    def _():
        acc_ref[...] = jnp.zeros_like(acc_ref)

    acc_ref[...] += jnp.dot(x_ref[...], w_ref[...],
                            preferred_element_type=jnp.float32)

    @pl.when(k == pl.num_programs(2) - 1)
    def _():
        o_ref[...] = (acc_ref[...] + b_ref[...].astype(jnp.float32)).astype(o_ref.dtype)


def _kgrid_kernel_nobias(x_ref, w_ref, o_ref, acc_ref):
    k = pl.program_id(2)

    @pl.when(k == 0)
    def _():
        acc_ref[...] = jnp.zeros_like(acc_ref)

    acc_ref[...] += jnp.dot(x_ref[...], w_ref[...],
                            preferred_element_type=jnp.float32)

    @pl.when(k == pl.num_programs(2) - 1)
    def _():
        o_ref[...] = acc_ref[...].astype(o_ref.dtype)


# ----------------------------------------------------------------------------
# Wrapper
# ----------------------------------------------------------------------------

def prepare_projection_weight(weight):
    """One-time (output_dim, input_dim) -> (input_dim, output_dim) relayout.

    Cache the result outside the jitted forward and pass it with
    transposed_weight=True to avoid a full extra HBM pass per call.
    """
    return jnp.asarray(weight).T


def linear_projection(x, weight, bias=None, *, transposed_weight=False,
                      tm=512, tn=1024, tk=512, k_resident=None,
                      vmem_tile_budget_bytes=40 * _MiB):
    """Projection.forward: y = x @ weight.T (+ bias), tiled for TPU.

    x:      (..., input_dim)
    weight: (output_dim, input_dim)  torch convention, or (input_dim, output_dim)
            if transposed_weight=True (use prepare_projection_weight to cache).
    bias:   (output_dim,) or None
    """
    orig_shape = x.shape
    K = orig_shape[-1]
    M = int(math.prod(orig_shape[:-1])) if len(orig_shape) > 1 else 1

    if transposed_weight:
        assert weight.shape[0] == K
        N = weight.shape[1]
        w_t = weight
    else:
        assert weight.shape[1] == K
        N = weight.shape[0]
        # NOTE: per-call transpose is an extra HBM pass over the weight; prefer
        # prepare_projection_weight() + transposed_weight=True for static weights.
        w_t = weight.T

    x2 = x.reshape(M, K)

    itemsize = jnp.dtype(x.dtype).itemsize
    m_align = 16 if itemsize < 4 else 8          # bf16 packs 2 rows per sublane

    tm, Mp = _fit_tile(M, tm, m_align)
    tn, Np = _fit_tile(N, tn, 128)

    # --- choose K-resident vs K-grid by actual VMEM tile footprint ------------
    Kp_res = _round_up(K, 128)
    kres_footprint = (2 * (tm * Kp_res + Kp_res * tn + tm * tn + 2 * tn) * itemsize
                      + tm * tn * 4)             # f32 dot-result headroom
    if k_resident is None:
        k_resident = kres_footprint <= vmem_tile_budget_bytes

    if k_resident:
        tk_eff, Kp = Kp_res, Kp_res
        footprint = kres_footprint
    else:
        # v6e/v7x MXUs are 256 wide; prefer 256-granular K slabs when K allows.
        k_align = 256 if K >= 512 else 128
        tk_eff, Kp = _fit_tile(K, tk, k_align)
        footprint = (2 * (tm * tk_eff + tk_eff * tn + tm * tn + 2 * tn) * itemsize
                     + tm * tn * 4)              # f32 accumulator scratch

    # --- pad operands (only when not already aligned) --------------------------
    if (Mp, Kp) != (M, K):
        x2 = jnp.pad(x2, ((0, Mp - M), (0, Kp - K)))
    if (Kp, Np) != (K, N):
        w_t = jnp.pad(w_t, ((0, Kp - K), (0, Np - N)))

    n_m, n_n = Mp // tm, Np // tn

    # --- cost estimate with real re-read factors (padded dims) -----------------
    if k_resident:
        bytes_accessed = (Mp * Kp + Kp * Np * n_m + Mp * Np) * itemsize
    else:
        bytes_accessed = (Mp * Kp * n_n + Kp * Np * n_m + Mp * Np) * itemsize
    cost = pl.CostEstimate(flops=2 * Mp * Np * Kp, transcendentals=0,
                           bytes_accessed=int(bytes_accessed))

    vmem_limit = int(min(max(footprint + 4 * _MiB, 16 * _MiB), 56 * _MiB))

    have_bias = bias is not None
    if have_bias:
        b2 = bias.reshape(1, N)
        if Np != N:
            b2 = jnp.pad(b2, ((0, 0), (0, Np - N)))

    if k_resident:
        grid = (n_m, n_n)
        # N is the inner grid axis: the x block index (i, 0) is unchanged across
        # consecutive steps, so Pallas skips the re-DMA -> x is read once per M tile.
        x_spec = pl.BlockSpec((tm, Kp), lambda i, j: (i, 0))
        w_spec = pl.BlockSpec((Kp, tn), lambda i, j: (0, j))
        o_spec = pl.BlockSpec((tm, tn), lambda i, j: (i, j))
        b_spec = pl.BlockSpec((1, tn), lambda i, j: (0, j))
        scratch = []
        dim_sems = ("parallel", "parallel")
        kernel = _kres_kernel_bias if have_bias else _kres_kernel_nobias
    else:
        grid = (n_m, n_n, Kp // tk_eff)
        x_spec = pl.BlockSpec((tm, tk_eff), lambda i, j, k: (i, k))
        w_spec = pl.BlockSpec((tk_eff, tn), lambda i, j, k: (k, j))
        o_spec = pl.BlockSpec((tm, tn), lambda i, j, k: (i, j))
        b_spec = pl.BlockSpec((1, tn), lambda i, j, k: (0, j))
        scratch = [pltpu.VMEM((tm, tn), jnp.float32)]
        dim_sems = ("parallel", "parallel", "arbitrary")
        kernel = _kgrid_kernel_bias if have_bias else _kgrid_kernel_nobias

    if have_bias:
        in_specs = [x_spec, w_spec, b_spec]
        args = (x2, w_t, b2)
    else:
        in_specs = [x_spec, w_spec]
        args = (x2, w_t)

    out = pl.pallas_call(
        kernel,
        out_shape=jax.ShapeDtypeStruct((Mp, Np), x.dtype),
        grid_spec=pltpu.PrefetchScalarGridSpec(
            num_scalar_prefetch=0,
            grid=grid,
            in_specs=in_specs,
            out_specs=o_spec,
            scratch_shapes=scratch,
        ),
        compiler_params=pltpu.CompilerParams(
            dimension_semantics=dim_sems,
            vmem_limit_bytes=vmem_limit,
        ),
        cost_estimate=cost,
    )(*args)

    out = out[:M, :N]
    return out.reshape(*orig_shape[:-1], N)


def column_sharded_linear(x, weight_full, bias_full, *, gang_size, gang_rank=0,
                          gather_output=True, **kwargs):
    """ColumnShardedLinear.forward (single-process simulation): shard selection
    is folded into a wrapper-side weight/bias slice on top of the same kernel."""
    out_dim = weight_full.shape[0]
    assert out_dim % gang_size == 0
    shard_out = out_dim // gang_size

    if gather_output:
        w, b = weight_full, bias_full
    else:
        lo, hi = gang_rank * shard_out, (gang_rank + 1) * shard_out
        w = weight_full[lo:hi]
        b = None if bias_full is None else bias_full[lo:hi]

    return linear_projection(x, w, b, **kwargs)


def _init_linear_params(key, input_dim, output_dim, dtype=jnp.float32):
    """kaiming_uniform_(a=sqrt(5)) on weight reduces to U(-1/sqrt(fan_in), ...)."""
    kw, kb = jax.random.split(key)
    bound = 1.0 / math.sqrt(input_dim)
    weight = jax.random.uniform(kw, (output_dim, input_dim), dtype=dtype,
                                minval=-bound, maxval=bound)
    bias = jax.random.uniform(kb, (output_dim,), dtype=dtype,
                              minval=-bound, maxval=bound)
    return weight, bias


if __name__ == "__main__":
    key = jax.random.PRNGKey(0)
    k_x, k_p, k_x2, k_w2, k_x3, k_w3 = jax.random.split(key, 6)

    hi = jax.lax.Precision.HIGHEST

    # --- Test 1: small shapes (K-resident path, single tile). -----------------
    batch, seq, input_dim, output_dim = 2, 8, 32, 64
    x = jax.random.normal(k_x, (batch, seq, input_dim), dtype=jnp.float32)
    weight, bias = _init_linear_params(k_p, input_dim, output_dim)
    y_ref = jnp.einsum("bsk,ok->bso", x, weight, precision=hi) + bias

    y = jax.block_until_ready(linear_projection(x, weight, bias))
    assert y.shape == (batch, seq, output_dim)
    assert jnp.allclose(y, y_ref, atol=1e-5, rtol=1e-5)

    # Cached pre-transposed weight (avoids the per-call transpose HBM pass).
    w_cached = prepare_projection_weight(weight)
    y_c = jax.block_until_ready(
        linear_projection(x, w_cached, bias, transposed_weight=True))
    assert jnp.allclose(y_c, y_ref, atol=1e-5, rtol=1e-5)

    # No-bias path.
    y_nb = jax.block_until_ready(linear_projection(x, weight, None))
    assert jnp.allclose(y_nb, jnp.einsum("bsk,ok->bso", x, weight, precision=hi),
                        atol=1e-5, rtol=1e-5)

    # --- Test 2: K-grid fallback path (M, N, K all tiled + ragged M). ----------
    B2, S2, K2, N2 = 2, 160, 256, 384            # M = 320
    x_big = jax.random.normal(k_x2, (B2, S2, K2), dtype=jnp.float32)
    w_big = jax.random.uniform(k_w2, (N2, K2), jnp.float32,
                               minval=-0.05, maxval=0.05)
    b_big = jnp.linspace(-1.0, 1.0, N2, dtype=jnp.float32)
    y_big = jax.block_until_ready(
        linear_projection(x_big, w_big, b_big,
                          tm=128, tn=128, tk=128, k_resident=False))
    y_big_ref = jnp.einsum("bsk,ok->bso", x_big, w_big, precision=hi) + b_big
    assert y_big.shape == (B2, S2, N2)
    assert jnp.allclose(y_big, y_big_ref, atol=2e-3, rtol=2e-3)

    # --- Test 3: bf16 inputs (halved HBM bytes; f32 accumulation in-kernel). ---
    M3, K3, N3 = 48, 128, 256
    x_bf = jax.random.normal(k_x3, (M3, K3), dtype=jnp.float32).astype(jnp.bfloat16)
    w_bf = jax.random.uniform(k_w3, (N3, K3), jnp.float32,
                              minval=-0.1, maxval=0.1).astype(jnp.bfloat16)
    y_bf = jax.block_until_ready(linear_projection(x_bf, w_bf, None))
    y_bf_ref = jnp.einsum("mk,ok->mo", x_bf.astype(jnp.float32),
                          w_bf.astype(jnp.float32), precision=hi)
    assert y_bf.dtype == jnp.bfloat16
    assert jnp.allclose(y_bf.astype(jnp.float32), y_bf_ref, atol=3e-2, rtol=3e-2)

    # --- Test 4: column-sharded wrapper (previous semantics preserved). --------
    gang_size = 2
    y_full = jax.block_until_ready(
        column_sharded_linear(x, weight, bias, gang_size=gang_size,
                              gather_output=True))
    assert jnp.allclose(y_full, y_ref, atol=1e-5, rtol=1e-5)

    rank = 1
    shard_out = output_dim // gang_size
    y_shard = jax.block_until_ready(
        column_sharded_linear(x, weight, bias, gang_size=gang_size,
                              gang_rank=rank, gather_output=False))
    assert y_shard.shape == (batch, seq, shard_out)
    assert jnp.allclose(y_shard,
                        y_ref[..., rank * shard_out:(rank + 1) * shard_out],
                        atol=1e-5, rtol=1e-5)

    print("KERNEL_OK")
</pallas_src>

<mosaic_0001>
module attributes {stable_mosaic.version = 11 : i64} {
  func.func @_kres_kernel_bias(%arg0: i32, %arg1: i32, %arg2: memref<16x128xf32, #tpu.memory_space<vmem>>, %arg3: memref<128x128xf32, #tpu.memory_space<vmem>>, %arg4: memref<1x128xf32, #tpu.memory_space<vmem>>, %arg5: memref<16x128xf32, #tpu.memory_space<vmem>>) attributes {dimension_semantics = [#tpu.dimension_semantics<parallel>, #tpu.dimension_semantics<parallel>], iteration_bounds = array<i64: 1, 1>, scalar_prefetch = 0 : i64, scratch_operands = 0 : i64, tpu.core_type = #tpu.core_type<tc>, window_params = [{transform_indices = @transform_0, window_bounds = array<i64: 16, 128>}, {transform_indices = @transform_1, window_bounds = array<i64: 128, 128>}, {transform_indices = @transform_2, window_bounds = array<i64: 1, 128>}, {transform_indices = @transform_3, window_bounds = array<i64: 16, 128>}]} {
    %c0 = arith.constant 0 : index
    %c0_0 = arith.constant 0 : index
    %0 = vector.load %arg2[%c0, %c0_0] : memref<16x128xf32, #tpu.memory_space<vmem>>, vector<16x128xf32>
    %c0_1 = arith.constant 0 : index
    %c0_2 = arith.constant 0 : index
    %1 = vector.load %arg3[%c0_1, %c0_2] : memref<128x128xf32, #tpu.memory_space<vmem>>, vector<128x128xf32>
    %cst = arith.constant dense<0.000000e+00> : vector<16x128xf32>
    %2 = tpu.matmul %0, %1, %cst {dimension_numbers = #tpu.dot_dimension_numbers<[1], [0], [0], [1], [0, 0, 1, 1], [], []>} : vector<16x128xf32>, vector<128x128xf32>, vector<16x128xf32> -> vector<16x128xf32>
    %c0_3 = arith.constant 0 : index
    %c0_4 = arith.constant 0 : index
    %3 = vector.load %arg4[%c0_3, %c0_4] : memref<1x128xf32, #tpu.memory_space<vmem>>, vector<1x128xf32>
    %4 = vector.broadcast %3 : vector<1x128xf32> to vector<16x128xf32>
    %5 = arith.addf %2, %4 : vector<16x128xf32>
    %c0_5 = arith.constant 0 : index
    %c0_6 = arith.constant 0 : index
    %6 = vector.load %arg5[%c0_5, %c0_6] : memref<16x128xf32, #tpu.memory_space<vmem>>, vector<16x128xf32>
    tpu.vector_store %arg5[%c0_5, %c0_6], %5 {strides = array<i32>} : memref<16x128xf32, #tpu.memory_space<vmem>>, vector<16x128xf32>,
    return
  }
  func.func @transform_0(%arg0: i32, %arg1: i32) -> (i32, i32) {
    %c0_i32 = arith.constant 0 : i32
    %c0_i32_0 = arith.constant 0 : i32
    return %arg0, %c0_i32 : i32, i32
  }
  func.func @transform_1(%arg0: i32, %arg1: i32) -> (i32, i32) {
    %c0_i32 = arith.constant 0 : i32
    %c0_i32_0 = arith.constant 0 : i32
    return %c0_i32, %arg1 : i32, i32
  }
  func.func @transform_2(%arg0: i32, %arg1: i32) -> (i32, i32) {
    %c0_i32 = arith.constant 0 : i32
    %c0_i32_0 = arith.constant 0 : i32
    return %c0_i32, %arg1 : i32, i32
  }
  func.func @transform_3(%arg0: i32, %arg1: i32) -> (i32, i32) {
    %c0_i32 = arith.constant 0 : i32
    return %arg0, %arg1 : i32, i32
  }
}

</mosaic_0001>

<llo_original>
// kernel: tpu_custom_call.1
$region0: #{tpu_custom_call.1}
  #allocation0 [shape = 'u32[]', space=smem, size = 0x4, offset = 0x4, fixed_abs, tag = 'smem constant byte address 0x4 - core index']
  #allocation1 [shape = 'u32[72,128]{1,0:T(1,128)}', space=vmem, size = 0x9000, scoped, tag = 'internal scratch']
  %s0 = inlined_call_operand.hbm [shape: f32[16,128], index: 0, kind: input, shape index: {}]
  %s1 = inlined_call_operand.hbm [shape: f32[128,128], index: 1, kind: input, shape index: {}]
  %s2 = inlined_call_operand.vmem [shape: f32[1,128], index: 2, kind: input, shape index: {}]
  %s3 = inlined_call_operand.hbm [shape: f32[16,128], index: 3, kind: output, shape index: {}]
  %s4 = sld [smem:[#allocation0]]
  $region30: #{tpu_custom_call.1} parent=0
    _
  %s6 = ssub.s32 1, %s4
  %s7 = scalar_select 0, %s6, %s4
  $region1: #{tpu_custom_call.1} parent=0
    #allocation2 [shape = 'u8[8192]{0}', space=vmem, size = 0x2000, scoped, tag = 'input window, operand 0, single buffered']
    #allocation3 [shape = 's32[1]{0}', space=sflag, size = 0x4, scoped, tag = 'scoped memory for tpu_custom_call.1']
    #allocation4 [shape = 's32[1]{0}', space=sflag, size = 0x4, scoped, tag = 'scoped memory for tpu_custom_call.1']
    #allocation5 [shape = 'u8[65536]{0}', space=vmem, size = 0x10000, scoped, tag = 'input window, operand 1, single buffered']
    #allocation6 [shape = 's32[1]{0}', space=sflag, size = 0x4, scoped, tag = 'scoped memory for tpu_custom_call.1']
    #allocation7 [shape = 'u8[8192]{0}', space=vmem, size = 0x2000, scoped, tag = 'output window, operand 0, single buffered']
    %8 = vsyncpa [#allocation3], 0
    %9 = vsyncpa [#allocation6], 0
    %10 = vsyncpa [#allocation4], 0
    // Predicated region
    $region2: #{tpu_custom_call.1} parent=1 // pred_check
      _
    $region3: #{tpu_custom_call.1} parent=1 // pred_check_branch
      %12 = sbr.rel (0) target = $region5
    $region4: #{tpu_custom_call.1} parent=1 // pred_region
      %14 = vsyncadd [#allocation3], 0
      %s15 = sshll.u32 %s0, 4
      %s16 = int_to_ptr.hbm [resolvable:$true] %s15
      %s17 = sshll.u32 [#allocation2], 4
      %s18 = int_to_ptr.vmem [resolvable:$true] %s17
      %23 = dma.hbm_to_vmem [thread:$0]  %s16, 256, %s18, [#allocation3], 128, 128, 8
    $region5: #{tpu_custom_call.1} parent=1 // pred_fallthru
      _
    // Predicated region
    $region6: #{tpu_custom_call.1} parent=1 // pred_check
      _
    $region7: #{tpu_custom_call.1} parent=1 // pred_check_branch
      %25 = sbr.rel (0) target = $region9
    $region8: #{tpu_custom_call.1} parent=1 // pred_region
      %27 = vsyncadd [#allocation6], 0
      %s28 = sshll.u32 %s1, 4
      %s29 = int_to_ptr.hbm [resolvable:$true] %s28
      %s30 = sshll.u32 [#allocation5], 4
      %s31 = int_to_ptr.vmem [resolvable:$true] %s30
      %36 = dma.hbm_to_vmem [thread:$0]  %s29, 2048, %s31, [#allocation6], 128, 128, 8
    $region9: #{tpu_custom_call.1} parent=1 // pred_fallthru
      _
    // Predicated region
    $region10: #{tpu_custom_call.1} parent=1 // pred_check
      _
    $region11: #{tpu_custom_call.1} parent=1 // pred_check_branch
      %38 = sbr.rel (0) target = $region13
    $region12: #{tpu_custom_call.1} parent=1 // pred_region
      _
    $region13: #{tpu_custom_call.1} parent=1 // pred_fallthru
      _
    // Predicated region
    $region14: #{tpu_custom_call.1} parent=1 // pred_check
      _
    $region15: #{tpu_custom_call.1} parent=1 // pred_check_branch
      %40 = sbr.rel (0) target = $region17
    $region16: #{tpu_custom_call.1} parent=1 // pred_region
      %42 = dma.done [#allocation3], 256
    $region17: #{tpu_custom_call.1} parent=1 // pred_fallthru
      _
    // Predicated region
    $region18: #{tpu_custom_call.1} parent=1 // pred_check
      _
    $region19: #{tpu_custom_call.1} parent=1 // pred_check_branch
      %44 = sbr.rel (0) target = $region21
    $region20: #{tpu_custom_call.1} parent=1 // pred_region
      %46 = dma.done [#allocation6], 2048
    $region21: #{tpu_custom_call.1} parent=1 // pred_fallthru
      _
    %v47 = vld [vmem:[#allocation2] sm:$0xff]
    %v48 = vld [vmem:[#allocation2 + $0x8] sm:$0xff]
    %v49 = vld [vmem:[#allocation5] sm:$0xff]
    %v50 = vld [vmem:[#allocation5 + $0x8] sm:$0xff]
    %v51 = vld [vmem:[#allocation5 + $0x10] sm:$0xff]
    %v52 = vld [vmem:[#allocation5 + $0x18] sm:$0xff]
    %v53 = vld [vmem:[#allocation5 + $0x20] sm:$0xff]
    %v54 = vld [vmem:[#allocation5 + $0x28] sm:$0xff]
    %v55 = vld [vmem:[#allocation5 + $0x30] sm:$0xff]
    %v56 = vld [vmem:[#allocation5 + $0x38] sm:$0xff]
    %v57 = vld [vmem:[#allocation5 + $0x40] sm:$0xff]
    %v58 = vld [vmem:[#allocation5 + $0x48] sm:$0xff]
    %v59 = vld [vmem:[#allocation5 + $0x50] sm:$0xff]
    %v60 = vld [vmem:[#allocation5 + $0x58] sm:$0xff]
    %v61 = vld [vmem:[#allocation5 + $0x60] sm:$0xff]
    %v62 = vld [vmem:[#allocation5 + $0x68] sm:$0xff]
    %v63 = vld [vmem:[#allocation5 + $0x70] sm:$0xff]
    %v64 = vld [vmem:[#allocation5 + $0x78] sm:$0xff]
    %v65 = vld [vmem:[%s2] sm:$0x1]
    %v67 = vperm.slane %v65, 0
    %69 = vmatpush.msra.mxu0 %v64
    %70 = vmatpush.msra.mxu0 %v63
    %71 = vmatpush.msra.mxu0 %v62
    %72 = vmatpush.msra.mxu0 %v61
    %73 = vmatpush.msra.mxu0 %v60
    %74 = vmatpush.msra.mxu0 %v59
    %75 = vmatpush.msra.mxu0 %v58
    %76 = vmatpush.msra.mxu0 %v57
    %77 = vmatpush.msra.mxu0 %v56
    %78 = vmatpush.msra.mxu0 %v55
    %79 = vmatpush.msra.mxu0 %v54
    %80 = vmatpush.msra.mxu0 %v53
    %81 = vmatpush.msra.mxu0 %v52
    %82 = vmatpush.msra.mxu0 %v51
    %83 = vmatpush.msra.mxu0 %v50
    %84 = vmatpush.msra.mxu0 %v49
    %85 = vmatmul.f32.gmra.mxu0 %v47
    %v86 = vpop.f32.mrf.mxu0
    %v87 = vadd.f32 %v67, %v86
    %88 = vmatmul.f32.gmra.mxu0 %v48
    %v89 = vpop.f32.mrf.mxu0
    %v90 = vadd.f32 %v67, %v89
    %91 = vdwg.mxu0
    %92 = vst [vmem:[#allocation7] sm:$0xff] %v87
    %93 = vst [vmem:[#allocation7 + $0x8] sm:$0xff] %v90
    // Predicated region
    $region22: #{tpu_custom_call.1} parent=1 // pred_check
      _
    $region23: #{tpu_custom_call.1} parent=1 // pred_check_branch
      %95 = sbr.rel (0) target = $region25
    $region24: #{tpu_custom_call.1} parent=1 // pred_region
      %97 = vsyncadd [#allocation4], 0
      %s98 = sshll.u32 [#allocation7], 4
      %s99 = int_to_ptr.vmem [resolvable:$true] %s98
      %s100 = sshll.u32 %s3, 4
      %s101 = int_to_ptr.hbm [resolvable:$true] %s100
      %106 = dma.vmem_to_hbm [thread:$0]  %s99, 256, %s101, [#allocation4], 128, 128, 8
    $region25: #{tpu_custom_call.1} parent=1 // pred_fallthru
      _
    // Predicated region
    $region26: #{tpu_custom_call.1} parent=1 // pred_check
      _
    $region27: #{tpu_custom_call.1} parent=1 // pred_check_branch
      %108 = sbr.rel (0) target = $region29
    $region28: #{tpu_custom_call.1} parent=1 // pred_region
      %110 = dma.done [#allocation4], 256
    $region29: #{tpu_custom_call.1} parent=1 // pred_fallthru
      _
    %111 = vsyncpa [#allocation3], 1
    %112 = vsyncpa [#allocation6], 1
    %113 = vsyncpa [#allocation4], 1

</llo_original>
